<compile_context>
chip_gen: v6e
topology: v6e:2x2x1
jax: 0.10.0
libtpu: 0.0.40
codegen_flags: <defaults>
</compile_context>

<pallas_src>
import jax
import jax.numpy as jnp
from jax import lax
from jax.experimental import pallas as pl
from jax.experimental.pallas import tpu as pltpu

CHARS = "0123456789ABCDEFGHIJKLMNOPQRSTUVWXYZ-"   # last char is the CTC blank
BLANK = len(CHARS) - 1
NEG = -1e30            # finite "minus infinity" (avoids inf-inf NaNs in log-space)

_GD_BLOCK_BYTES = 2 * 1024 * 1024      # per-input streamed bytes per grid step (f32)
_CTC_EMIT_VMEM_BYTES = 8 * 1024 * 1024  # budget for double-buffered emission blocks


def _round_up(x, m):
    return ((x + m - 1) // m) * m


def _cdiv(a, b):
    return -(-a // b)


# ----------------------------------------------------------------------------
# GaussDistanceLoss kernel: score MSE + gaussian-score-weighted coordinate MSE
# ----------------------------------------------------------------------------
# TODO(synk): the original GaussDistanceLoss source is not part of the provided
# module; this implements the standard gaussian-weighted distance formulation
# (score-map MSE + score-weighted coord MSE), det_loss = score_loss + coord_loss.
def _make_gd_kernel(C, R, r_tile, r_acc, needs_mask):
    fold = (r_tile % 8 == 0)

    def kernel(pred_ref, lab_ref, out_ref, acc_ref):
        j = pl.program_id(1)                              # spatial-tile (reduction) axis

        @pl.when(j == 0)
        def _():
            acc_ref[...] = jnp.zeros_like(acc_ref)

        # score channel (channel 0)
        sp = pred_ref[0, 0].astype(jnp.float32)           # (r_tile, 128)
        sg = lab_ref[0, 0].astype(jnp.float32)

        d_s = (sp - sg) ** 2                              # squared score error
        w = sg                                            # gaussian score weight
        if needs_mask:                                    # ragged last tile only
            row = lax.broadcasted_iota(jnp.int32, (r_tile, 128), 0) + j * r_tile
            valid = row < R
            d_s = jnp.where(valid, d_s, 0.0)
            w = jnp.where(valid, sg, 0.0)

        # coordinate channels, one (r_tile,128) slab at a time (small live ranges)
        d_c = jnp.zeros((r_tile, 128), jnp.float32)
        for ci in range(1, C):
            cp = pred_ref[0, ci].astype(jnp.float32)
            cg = lab_ref[0, ci].astype(jnp.float32)
            diff = cp - cg
            if needs_mask:
                diff = jnp.where(valid, diff, 0.0)
            d_c = d_c + w * diff * diff

        if fold:
            def red(x):                                   # pure VPU vreg adds
                return x.reshape(r_tile // 8, 8, 128).sum(axis=0)
        else:                                             # only when r_tile == R < 8k, R%8!=0
            def red(x):
                return x

        acc_ref[0] += red(d_s)
        acc_ref[1] += red(d_c)
        acc_ref[2] += red(w)

        @pl.when(j == pl.num_programs(1) - 1)
        def _():
            out_ref[0] = acc_ref[...]

    return kernel


def gauss_distance_loss(det_maps, det_labels):
    N, C, H, W = det_maps.shape
    HW = H * W
    HW128 = _round_up(HW, 128)

    pred = det_maps.reshape(N, C, HW)                     # free (contiguous) reshape
    lab = det_labels.reshape(N, C, HW)
    if HW128 != HW:
        # TODO(synk): spatial sizes not multiple of 128 need one zero-pad copy here.
        pad = ((0, 0), (0, 0), (0, HW128 - HW))
        pred = jnp.pad(pred, pad)
        lab = jnp.pad(lab, pad)
    R = HW128 // 128
    pred = pred.reshape(N, C, R, 128)                     # lane-dense view, no copy
    lab = lab.reshape(N, C, R, 128)

    # Large dense tiles: ~_GD_BLOCK_BYTES of f32 per input per grid step.
    r_cap = max(8, (_GD_BLOCK_BYTES // (C * 128 * 4)) // 8 * 8)
    if R <= r_cap:
        r_tile, n_tiles = R, 1
    else:
        r_tile = r_cap
        n_tiles = _cdiv(R, r_tile)
    needs_mask = (n_tiles * r_tile != R)
    r_acc = 8 if r_tile % 8 == 0 else r_tile

    kernel = _make_gd_kernel(C, R, r_tile, r_acc, needs_mask)

    sums = pl.pallas_call(
        kernel,
        out_shape=jax.ShapeDtypeStruct((N, 3, r_acc, 128), jnp.float32),
        grid_spec=pltpu.PrefetchScalarGridSpec(
            num_scalar_prefetch=0,
            grid=(N, n_tiles),
            in_specs=[
                pl.BlockSpec((1, C, r_tile, 128), lambda n, j: (n, 0, j, 0)),
                pl.BlockSpec((1, C, r_tile, 128), lambda n, j: (n, 0, j, 0)),
            ],
            out_specs=pl.BlockSpec((1, 3, r_acc, 128), lambda n, j: (n, 0, 0, 0)),
            scratch_shapes=[pltpu.VMEM((3, r_acc, 128), jnp.float32)],
        ),
        compiler_params=pltpu.CompilerParams(
            dimension_semantics=("parallel", "arbitrary")),
    )(pred, lab)

    # Tiny final reductions on the (N, 3, r_acc, 128) partial sums (XLA side).
    sum_sq_score = jnp.sum(sums[:, 0])
    sum_wcoord = jnp.sum(sums[:, 1])
    sum_w = jnp.sum(sums[:, 2])

    score_loss = sum_sq_score / jnp.float32(N * H * W)
    coord_loss = sum_wcoord / (sum_w * jnp.float32(max(C - 1, 1)) + 1e-6)
    det_loss = score_loss + coord_loss
    return det_loss, coord_loss, score_loss


# ----------------------------------------------------------------------------
# CTC loss kernel (forward / alpha recursion over time, log-space)
# ----------------------------------------------------------------------------
def _ctc_kernel(max_il_ref, emit_ref, skip_ref, il_ref, fmask_ref, out_ref, alpha_ref):
    c = pl.program_id(1)                                  # time-chunk (reduction) axis
    t_chunk = emit_ref.shape[0]
    n_b, s_pad = alpha_ref.shape

    s_idx = lax.broadcasted_iota(jnp.int32, (n_b, s_pad), 1)

    # Seed alpha at t = 0: only positions 0 (blank) and 1 (first label) reachable.
    # (relies on input_lengths >= 1; zero-length inputs give nll ~ 1e30, unlike torch's inf)
    @pl.when(c == 0)
    def _():
        e0 = emit_ref[0].astype(jnp.float32)
        alpha_ref[...] = jnp.where(s_idx < 2, e0, NEG)

    # Skip whole chunks once past the longest sequence.
    @pl.when(c * t_chunk < max_il_ref[0])
    def _():
        il = il_ref[...].astype(jnp.int32)                # (n_b, 1)
        # additive transition masks, hoisted out of the serial time loop
        mask1 = jnp.where(s_idx >= 1, 0.0, NEG)
        mask2 = jnp.where((s_idx >= 2) & (skip_ref[...] > 0), 0.0, NEG)

        def step(i, alpha):
            t = c * t_chunk + i
            e = emit_ref[i].astype(jnp.float32)           # (n_b, s_pad)
            a1 = pltpu.roll(alpha, shift=1, axis=1) + mask1
            a2 = pltpu.roll(alpha, shift=2, axis=1) + mask2
            m = jnp.maximum(jnp.maximum(alpha, a1), a2)
            lse = m + jnp.log(jnp.exp(alpha - m) + jnp.exp(a1 - m) + jnp.exp(a2 - m))
            new = jnp.maximum(e + lse, NEG)               # keep padded lanes finite
            return jnp.where(t < il, new, alpha)          # freeze once t >= input_length

        @pl.when(c == 0)
        def _():
            alpha_ref[...] = lax.fori_loop(1, t_chunk, step, alpha_ref[...])

        @pl.when(c > 0)
        def _():
            alpha_ref[...] = lax.fori_loop(0, t_chunk, step, alpha_ref[...])

    @pl.when(c == pl.num_programs(1) - 1)
    def _():
        a = alpha_ref[...]
        masked = jnp.where(fmask_ref[...] > 0, a, NEG)    # keep s = 2L, 2L-1
        mm = jnp.max(masked, axis=1, keepdims=True)
        nll = -(mm + jnp.log(jnp.sum(jnp.exp(masked - mm), axis=1, keepdims=True)))
        out_ref[...] = nll                                # (n_b, 1)


def ctc_loss_mean(log_probs, targets, input_lengths, target_lengths):
    """nn.CTCLoss(blank=BLANK, reduction='mean') semantics."""
    T, N, C = log_probs.shape
    S = targets.shape[1]
    S_ext = 2 * S + 1
    S_pad = _round_up(S_ext, 128)                         # lane-dense extended-target axis

    ext = jnp.full((N, S_ext), BLANK, dtype=jnp.int32)
    ext = ext.at[:, 1::2].set(targets.astype(jnp.int32))
    # NOTE: padded entries of `targets` beyond target_length must be valid class
    # indices (< C); take_along_axis clamps silently otherwise.

    # Precompute emissions in the wrapper (fuses with the upstream log_softmax);
    # the kernel never sees the C axis or a one-hot tensor.
    emit = jnp.take_along_axis(
        log_probs, jnp.broadcast_to(ext[None, :, :], (T, N, S_ext)), axis=2)
    emit = jnp.pad(emit, ((0, 0), (0, 0), (0, S_pad - S_ext)), constant_values=NEG)

    # Batch blocking: megacore-parallel on v7x and caps per-block emission VMEM.
    if N % 8 == 0 and N > 8:
        n_blk = 8
    else:
        n_blk = N
    n_bblocks = N // n_blk

    # Balanced time chunking, capped by an emission-VMEM budget (double buffered).
    itemsize = jnp.dtype(emit.dtype).itemsize
    row_bytes = n_blk * S_pad * itemsize
    t_cap = max(8, min(128, _CTC_EMIT_VMEM_BYTES // (2 * row_bytes)))
    n_chunks = _cdiv(T, t_cap)
    t_chunk = _cdiv(T, n_chunks)
    t_pad = t_chunk * n_chunks
    if t_pad != T:
        emit = jnp.pad(emit, ((0, t_pad - T), (0, 0), (0, 0)), constant_values=NEG)

    skip = jnp.zeros((N, S_ext), jnp.float32)
    skip = skip.at[:, 2:].set(
        ((ext[:, 2:] != BLANK) & (ext[:, 2:] != ext[:, :-2])).astype(jnp.float32))
    skip = jnp.pad(skip, ((0, 0), (0, S_pad - S_ext)))

    s_pos = jnp.arange(S_pad)[None, :]
    tl = target_lengths.astype(jnp.int32)[:, None]
    fmask = ((s_pos == 2 * tl) | (s_pos == 2 * tl - 1)).astype(jnp.float32)
    il = input_lengths.astype(jnp.int32)[:, None]
    max_il = jnp.max(input_lengths).astype(jnp.int32).reshape(1)   # SMEM prefetch

    nll = pl.pallas_call(
        _ctc_kernel,
        out_shape=jax.ShapeDtypeStruct((N, 1), jnp.float32),
        grid_spec=pltpu.PrefetchScalarGridSpec(
            num_scalar_prefetch=1,
            grid=(n_bblocks, n_chunks),
            in_specs=[
                pl.BlockSpec((t_chunk, n_blk, S_pad), lambda b, c, mi: (c, b, 0)),  # emissions
                pl.BlockSpec((n_blk, S_pad), lambda b, c, mi: (b, 0)),              # skip mask
                pl.BlockSpec((n_blk, 1), lambda b, c, mi: (b, 0)),                  # input lengths
                pl.BlockSpec((n_blk, S_pad), lambda b, c, mi: (b, 0)),              # final mask
            ],
            out_specs=pl.BlockSpec((n_blk, 1), lambda b, c, mi: (b, 0)),
            scratch_shapes=[pltpu.VMEM((n_blk, S_pad), jnp.float32)],               # alpha
        ),
        compiler_params=pltpu.CompilerParams(
            dimension_semantics=("parallel", "arbitrary")),
    )(max_il, emit, skip, il, fmask)

    nll = nll[:, 0]
    # PyTorch 'mean': divide each sample by its target length, then batch mean.
    # (clamp guards zero-length targets; torch would give inf there)
    denom = jnp.maximum(target_lengths.astype(jnp.float32), 1.0)
    return jnp.mean(nll / denom)


# ----------------------------------------------------------------------------
# TotalLoss forward
# ----------------------------------------------------------------------------
def total_loss(det_maps, det_labels, log_probs, reg_labels, input_lengths,
               target_lengths, mode='det_reg'):
    assert mode in ('det_only', 'det_reg')
    det_loss, coord_loss, score_loss = gauss_distance_loss(det_maps, det_labels)
    if mode == 'det_only':
        return det_loss, coord_loss, score_loss
    # torch code compares log_probs against the sentinel tensor(-1); here the
    # "no recognition samples" sentinel is log_probs=None.
    if log_probs is None:
        reg_loss = jnp.float32(0.0)
        return det_loss, det_loss, reg_loss, coord_loss, score_loss
    reg_loss = ctc_loss_mean(log_probs, reg_labels, input_lengths, target_lengths)
    total = det_loss + reg_loss
    return total, det_loss, reg_loss, coord_loss, score_loss


if __name__ == "__main__":
    key = jax.random.PRNGKey(0)
    k1, k2, k3, k4, k5 = jax.random.split(key, 5)

    # small shapes consistent with the forward
    N, C_det, H, W = 2, 5, 16, 16
    T, S = 12, 5
    C = len(CHARS)

    det_maps = jax.random.normal(k1, (N, C_det, H, W), jnp.float32)
    score_gt = jax.nn.sigmoid(2.0 * jax.random.normal(k2, (N, 1, H, W), jnp.float32))
    coord_gt = jax.random.normal(k3, (N, C_det - 1, H, W), jnp.float32)
    det_labels = jnp.concatenate([score_gt, coord_gt], axis=1)

    logits = jax.random.normal(k4, (T, N, C), jnp.float32)
    log_probs = jax.nn.log_softmax(logits, axis=-1)
    reg_labels = jax.random.randint(k5, (N, S), 0, BLANK, dtype=jnp.int32)
    target_lengths = jnp.array([4, 3], dtype=jnp.int32)
    input_lengths = jnp.array([12, 10], dtype=jnp.int32)

    outs = total_loss(det_maps, det_labels, log_probs, reg_labels,
                      input_lengths, target_lengths, mode='det_reg')
    outs = jax.block_until_ready(outs)
    total, det_l, reg_l, coord_l, score_l = outs
    assert all(bool(jnp.isfinite(o)) for o in outs)
    print("KERNEL_OK")
</pallas_src>

<mosaic_0001>
module attributes {stable_mosaic.version = 11 : i64} {
  func.func @kernel(%arg0: i32, %arg1: i32, %arg2: memref<1x5x2x128xf32, #tpu.memory_space<vmem>>, %arg3: memref<1x5x2x128xf32, #tpu.memory_space<vmem>>, %arg4: memref<1x3x2x128xf32, #tpu.memory_space<vmem>>, %arg5: memref<3x2x128xf32, #tpu.memory_space<vmem>>) attributes {dimension_semantics = [#tpu.dimension_semantics<parallel>, #tpu.dimension_semantics<arbitrary>], iteration_bounds = array<i64: 2, 1>, scalar_prefetch = 0 : i64, scratch_operands = 1 : i64, tpu.core_type = #tpu.core_type<tc>, window_params = [{transform_indices = @transform_0, window_bounds = array<i64: 1, 5, 2, 128>}, {transform_indices = @transform_1, window_bounds = array<i64: 1, 5, 2, 128>}, {transform_indices = @transform_2, window_bounds = array<i64: 1, 3, 2, 128>}]} {
    %c0_i32 = arith.constant 0 : i32
    %0 = arith.cmpi eq, %arg1, %c0_i32 : i32
    %1 = arith.extui %0 : i1 to i32
    %c0_i32_0 = arith.constant 0 : i32
    %2 = arith.cmpi ne, %1, %c0_i32_0 : i32
    scf.if %2 {
      %cst_56 = arith.constant 0.000000e+00 : f32
      %63 = vector.broadcast %cst_56 : f32 to vector<3x2x128xf32>
      %c0_57 = arith.constant 0 : index
      %c0_58 = arith.constant 0 : index
      %c0_59 = arith.constant 0 : index
      %64 = vector.load %arg5[%c0_57, %c0_58, %c0_59] : memref<3x2x128xf32, #tpu.memory_space<vmem>>, vector<3x2x128xf32>
      tpu.vector_store %arg5[%c0_57, %c0_58, %c0_59], %63 {strides = array<i32>} : memref<3x2x128xf32, #tpu.memory_space<vmem>>, vector<3x2x128xf32>,
    } else {
    }
    %c0 = arith.constant 0 : index
    %c0_1 = arith.constant 0 : index
    %c0_2 = arith.constant 0 : index
    %c0_3 = arith.constant 0 : index
    %3 = vector.load %arg2[%c0, %c0_1, %c0_2, %c0_3] : memref<1x5x2x128xf32, #tpu.memory_space<vmem>>, vector<1x1x2x128xf32>
    %4 = vector.shape_cast %3 : vector<1x1x2x128xf32> to vector<2x128xf32>
    %c0_4 = arith.constant 0 : index
    %c0_5 = arith.constant 0 : index
    %c0_6 = arith.constant 0 : index
    %c0_7 = arith.constant 0 : index
    %5 = vector.load %arg3[%c0_4, %c0_5, %c0_6, %c0_7] : memref<1x5x2x128xf32, #tpu.memory_space<vmem>>, vector<1x1x2x128xf32>
    %6 = vector.shape_cast %5 : vector<1x1x2x128xf32> to vector<2x128xf32>
    %7 = arith.subf %4, %6 : vector<2x128xf32>
    %8 = arith.mulf %7, %7 : vector<2x128xf32>
    %cst = arith.constant 0.000000e+00 : f32
    %9 = vector.broadcast %cst : f32 to vector<2x128xf32>
    %c0_8 = arith.constant 0 : index
    %c1 = arith.constant 1 : index
    %c0_9 = arith.constant 0 : index
    %c0_10 = arith.constant 0 : index
    %10 = vector.load %arg2[%c0_8, %c1, %c0_9, %c0_10] : memref<1x5x2x128xf32, #tpu.memory_space<vmem>>, vector<1x1x2x128xf32>
    %11 = vector.shape_cast %10 : vector<1x1x2x128xf32> to vector<2x128xf32>
    %c0_11 = arith.constant 0 : index
    %c1_12 = arith.constant 1 : index
    %c0_13 = arith.constant 0 : index
    %c0_14 = arith.constant 0 : index
    %12 = vector.load %arg3[%c0_11, %c1_12, %c0_13, %c0_14] : memref<1x5x2x128xf32, #tpu.memory_space<vmem>>, vector<1x1x2x128xf32>
    %13 = vector.shape_cast %12 : vector<1x1x2x128xf32> to vector<2x128xf32>
    %14 = arith.subf %11, %13 : vector<2x128xf32>
    %15 = arith.mulf %6, %14 : vector<2x128xf32>
    %16 = arith.mulf %15, %14 : vector<2x128xf32>
    %17 = arith.addf %9, %16 : vector<2x128xf32>
    %c0_15 = arith.constant 0 : index
    %c2 = arith.constant 2 : index
    %c0_16 = arith.constant 0 : index
    %c0_17 = arith.constant 0 : index
    %18 = vector.load %arg2[%c0_15, %c2, %c0_16, %c0_17] : memref<1x5x2x128xf32, #tpu.memory_space<vmem>>, vector<1x1x2x128xf32>
    %19 = vector.shape_cast %18 : vector<1x1x2x128xf32> to vector<2x128xf32>
    %c0_18 = arith.constant 0 : index
    %c2_19 = arith.constant 2 : index
    %c0_20 = arith.constant 0 : index
    %c0_21 = arith.constant 0 : index
    %20 = vector.load %arg3[%c0_18, %c2_19, %c0_20, %c0_21] : memref<1x5x2x128xf32, #tpu.memory_space<vmem>>, vector<1x1x2x128xf32>
    %21 = vector.shape_cast %20 : vector<1x1x2x128xf32> to vector<2x128xf32>
    %22 = arith.subf %19, %21 : vector<2x128xf32>
    %23 = arith.mulf %6, %22 : vector<2x128xf32>
    %24 = arith.mulf %23, %22 : vector<2x128xf32>
    %25 = arith.addf %17, %24 : vector<2x128xf32>
    %c0_22 = arith.constant 0 : index
    %c3 = arith.constant 3 : index
    %c0_23 = arith.constant 0 : index
    %c0_24 = arith.constant 0 : index
    %26 = vector.load %arg2[%c0_22, %c3, %c0_23, %c0_24] : memref<1x5x2x128xf32, #tpu.memory_space<vmem>>, vector<1x1x2x128xf32>
    %27 = vector.shape_cast %26 : vector<1x1x2x128xf32> to vector<2x128xf32>
    %c0_25 = arith.constant 0 : index
    %c3_26 = arith.constant 3 : index
    %c0_27 = arith.constant 0 : index
    %c0_28 = arith.constant 0 : index
    %28 = vector.load %arg3[%c0_25, %c3_26, %c0_27, %c0_28] : memref<1x5x2x128xf32, #tpu.memory_space<vmem>>, vector<1x1x2x128xf32>
    %29 = vector.shape_cast %28 : vector<1x1x2x128xf32> to vector<2x128xf32>
    %30 = arith.subf %27, %29 : vector<2x128xf32>
    %31 = arith.mulf %6, %30 : vector<2x128xf32>
    %32 = arith.mulf %31, %30 : vector<2x128xf32>
    %33 = arith.addf %25, %32 : vector<2x128xf32>
    %c0_29 = arith.constant 0 : index
    %c4 = arith.constant 4 : index
    %c0_30 = arith.constant 0 : index
    %c0_31 = arith.constant 0 : index
    %34 = vector.load %arg2[%c0_29, %c4, %c0_30, %c0_31] : memref<1x5x2x128xf32, #tpu.memory_space<vmem>>, vector<1x1x2x128xf32>
    %35 = vector.shape_cast %34 : vector<1x1x2x128xf32> to vector<2x128xf32>
    %c0_32 = arith.constant 0 : index
    %c4_33 = arith.constant 4 : index
    %c0_34 = arith.constant 0 : index
    %c0_35 = arith.constant 0 : index
    %36 = vector.load %arg3[%c0_32, %c4_33, %c0_34, %c0_35] : memref<1x5x2x128xf32, #tpu.memory_space<vmem>>, vector<1x1x2x128xf32>
    %37 = vector.shape_cast %36 : vector<1x1x2x128xf32> to vector<2x128xf32>
    %38 = arith.subf %35, %37 : vector<2x128xf32>
    %39 = arith.mulf %6, %38 : vector<2x128xf32>
    %40 = arith.mulf %39, %38 : vector<2x128xf32>
    %41 = arith.addf %33, %40 : vector<2x128xf32>
    %c0_36 = arith.constant 0 : index
    %c0_37 = arith.constant 0 : index
    %c0_38 = arith.constant 0 : index
    %42 = vector.load %arg5[%c0_36, %c0_37, %c0_38] : memref<3x2x128xf32, #tpu.memory_space<vmem>>, vector<1x2x128xf32>
    %43 = vector.shape_cast %42 : vector<1x2x128xf32> to vector<2x128xf32>
    %44 = arith.addf %43, %8 : vector<2x128xf32>
    %c0_39 = arith.constant 0 : index
    %c0_40 = arith.constant 0 : index
    %c0_41 = arith.constant 0 : index
    %45 = vector.load %arg5[%c0_39, %c0_40, %c0_41] : memref<3x2x128xf32, #tpu.memory_space<vmem>>, vector<1x2x128xf32>
    %46 = vector.shape_cast %45 : vector<1x2x128xf32> to vector<2x128xf32>
    %47 = vector.shape_cast %44 : vector<2x128xf32> to vector<1x2x128xf32>
    tpu.vector_store %arg5[%c0_39, %c0_40, %c0_41], %47 {strides = array<i32>} : memref<3x2x128xf32, #tpu.memory_space<vmem>>, vector<1x2x128xf32>,
    %c1_42 = arith.constant 1 : index
    %c0_43 = arith.constant 0 : index
    %c0_44 = arith.constant 0 : index
    %48 = vector.load %arg5[%c1_42, %c0_43, %c0_44] : memref<3x2x128xf32, #tpu.memory_space<vmem>>, vector<1x2x128xf32>
    %49 = vector.shape_cast %48 : vector<1x2x128xf32> to vector<2x128xf32>
    %50 = arith.addf %49, %41 : vector<2x128xf32>
    %c1_45 = arith.constant 1 : index
    %c0_46 = arith.constant 0 : index
    %c0_47 = arith.constant 0 : index
    %51 = vector.load %arg5[%c1_45, %c0_46, %c0_47] : memref<3x2x128xf32, #tpu.memory_space<vmem>>, vector<1x2x128xf32>
    %52 = vector.shape_cast %51 : vector<1x2x128xf32> to vector<2x128xf32>
    %53 = vector.shape_cast %50 : vector<2x128xf32> to vector<1x2x128xf32>
    tpu.vector_store %arg5[%c1_45, %c0_46, %c0_47], %53 {strides = array<i32>} : memref<3x2x128xf32, #tpu.memory_space<vmem>>, vector<1x2x128xf32>,
    %c2_48 = arith.constant 2 : index
    %c0_49 = arith.constant 0 : index
    %c0_50 = arith.constant 0 : index
    %54 = vector.load %arg5[%c2_48, %c0_49, %c0_50] : memref<3x2x128xf32, #tpu.memory_space<vmem>>, vector<1x2x128xf32>
    %55 = vector.shape_cast %54 : vector<1x2x128xf32> to vector<2x128xf32>
    %56 = arith.addf %55, %6 : vector<2x128xf32>
    %c2_51 = arith.constant 2 : index
    %c0_52 = arith.constant 0 : index
    %c0_53 = arith.constant 0 : index
    %57 = vector.load %arg5[%c2_51, %c0_52, %c0_53] : memref<3x2x128xf32, #tpu.memory_space<vmem>>, vector<1x2x128xf32>
    %58 = vector.shape_cast %57 : vector<1x2x128xf32> to vector<2x128xf32>
    %59 = vector.shape_cast %56 : vector<2x128xf32> to vector<1x2x128xf32>
    tpu.vector_store %arg5[%c2_51, %c0_52, %c0_53], %59 {strides = array<i32>} : memref<3x2x128xf32, #tpu.memory_space<vmem>>, vector<1x2x128xf32>,
    %c0_i32_54 = arith.constant 0 : i32
    %60 = arith.cmpi eq, %arg1, %c0_i32_54 : i32
    %61 = arith.extui %60 : i1 to i32
    %c0_i32_55 = arith.constant 0 : i32
    %62 = arith.cmpi ne, %61, %c0_i32_55 : i32
    scf.if %62 {
      %c0_56 = arith.constant 0 : index
      %c0_57 = arith.constant 0 : index
      %c0_58 = arith.constant 0 : index
      %63 = vector.load %arg5[%c0_56, %c0_57, %c0_58] : memref<3x2x128xf32, #tpu.memory_space<vmem>>, vector<3x2x128xf32>
      %c0_59 = arith.constant 0 : index
      %c0_60 = arith.constant 0 : index
      %c0_61 = arith.constant 0 : index
      %c0_62 = arith.constant 0 : index
      %64 = vector.load %arg4[%c0_59, %c0_60, %c0_61, %c0_62] : memref<1x3x2x128xf32, #tpu.memory_space<vmem>>, vector<1x3x2x128xf32>
      %65 = vector.shape_cast %64 : vector<1x3x2x128xf32> to vector<3x2x128xf32>
      %66 = vector.shape_cast %63 : vector<3x2x128xf32> to vector<1x3x2x128xf32>
      tpu.vector_store %arg4[%c0_59, %c0_60, %c0_61, %c0_62], %66 {strides = array<i32>} : memref<1x3x2x128xf32, #tpu.memory_space<vmem>>, vector<1x3x2x128xf32>,
    } else {
    }
    return
  }
  func.func @transform_0(%arg0: i32, %arg1: i32) -> (i32, i32, i32, i32) {
    %c0_i32 = arith.constant 0 : i32
    %c0_i32_0 = arith.constant 0 : i32
    %c0_i32_1 = arith.constant 0 : i32
    return %arg0, %c0_i32, %arg1, %c0_i32_0 : i32, i32, i32, i32
  }
  func.func @transform_1(%arg0: i32, %arg1: i32) -> (i32, i32, i32, i32) {
    %c0_i32 = arith.constant 0 : i32
    %c0_i32_0 = arith.constant 0 : i32
    %c0_i32_1 = arith.constant 0 : i32
    return %arg0, %c0_i32, %arg1, %c0_i32_0 : i32, i32, i32, i32
  }
  func.func @transform_2(%arg0: i32, %arg1: i32) -> (i32, i32, i32, i32) {
    %c0_i32 = arith.constant 0 : i32
    %c0_i32_0 = arith.constant 0 : i32
    %c0_i32_1 = arith.constant 0 : i32
    %c0_i32_2 = arith.constant 0 : i32
    return %arg0, %c0_i32, %c0_i32_0, %c0_i32_1 : i32, i32, i32, i32
  }
}

</mosaic_0001>

<llo_original>
// kernel: tpu_custom_call.1
$region0: #{tpu_custom_call.1}
  #allocation0 [shape = 'u32[]', space=smem, size = 0x4, offset = 0x4, fixed_abs, tag = 'smem constant byte address 0x4 - core index']
  #allocation1 [shape = 'u32[144,128]{1,0:T(1,128)}', space=vmem, size = 0x12000, scoped, tag = 'internal scratch']
  #allocation2 [shape = 'f32[3,2,128]{2,1,0:T(2,128)}', space=vmem, size = 0xc00, scoped, tag = 'scratch operand']
  %s0 = inlined_call_operand.hbm [shape: f32[2,5,2,128], index: 0, kind: input, shape index: {}]
  %s1 = inlined_call_operand.hbm [shape: f32[2,5,2,128], index: 1, kind: input, shape index: {}]
  %s2 = inlined_call_operand.hbm [shape: f32[2,3,2,128], index: 2, kind: output, shape index: {}]
  %s3 = sld [smem:[#allocation0]]
  $region57: #{tpu_custom_call.1} parent=0
    _
  %s5 = ssub.s32 1, %s3
  %s6 = scalar_select 0, %s5, %s3
  $region1: #{tpu_custom_call.1} parent=0
    #allocation3 [shape = 'u8[10240]{0}', space=vmem, size = 0x2800, scoped, tag = 'input window, operand 0']
    #allocation4 [shape = 's32[2]{0}', space=sflag, size = 0x8, scoped, tag = 'scoped memory for tpu_custom_call.1']
    #allocation5 [shape = 's32[2]{0}', space=sflag, size = 0x8, scoped, tag = 'scoped memory for tpu_custom_call.1']
    #allocation6 [shape = 'u8[10240]{0}', space=vmem, size = 0x2800, scoped, tag = 'input window, operand 1']
    #allocation7 [shape = 's32[2]{0}', space=sflag, size = 0x8, scoped, tag = 'scoped memory for tpu_custom_call.1']
    #allocation8 [shape = 'u8[6144]{0}', space=vmem, size = 0x1800, scoped, tag = 'output window, operand 0']
    %7 = vsyncpa [#allocation4], 0
    %s8 = scalar_lea.sflag [#allocation4], 1
    %9 = vsyncpa %s8, 0
    %10 = vsyncpa [#allocation7], 0
    %s11 = scalar_lea.sflag [#allocation7], 1
    %12 = vsyncpa %s11, 0
    %13 = vsyncpa [#allocation5], 0
    %s14 = scalar_lea.sflag [#allocation5], 1
    %15 = vsyncpa %s14, 0
    loop: start=0, step=1, limit=4
    $region2: #{tpu_custom_call.1} parent=1 // loop_pre_header
      _
    $region3: #{tpu_custom_call.1} parent=1 // loop_header
      %s17 = sphi 0, %s21
      %p18 = scmp.ge.s32.totalorder %s17, 4
      %s24 = sphi 0, %s36
      %s25 = sphi 0, %s32
      %s26 = sphi 0, %s24
      %s27 = sphi 0, %s25
      %s28 = sphi 0, %s26
      %s29 = sphi 0, %s27
      %s41 = sphi 0, %s43
      %s44 = sphi 0, %s41
      %s45 = sphi 0, %s44
      %s61 = sphi 0, %s45
      %s69 = sphi 0, %s71
      %s72 = sphi 0, %s69
      %s73 = sphi 0, %s72
      %s89 = sphi 0, %s73
      %s95 = sphi 0, %s97
      %s98 = sphi 0, %s95
      %s99 = sphi 0, %s98
      %s115 = sphi 0, %s99
    $region4: #{tpu_custom_call.1} parent=1 // loop_header_branch
      %20 = sbr.rel (%p18) target = $region8
    $region5: #{tpu_custom_call.1} parent=1 // loop_body
      %s22 = ssub.s32 %s17, 1
      %s23 = ssub.s32 %s17, 2
      %s30 = sadd.s32 1, %s25
      %p31 = scmp.ge.s32.totalorder %s30, 1
      %s32 = scalar_select %p31, 0, %s30
      %s33 = sadd.s32 1, %s24
      %s34 = scalar_select %p31, %s33, %s24
      %p35 = scmp.ge.s32.totalorder %s34, 2
      %s36 = scalar_select %p35, 0, %s34
      %s37 = ssub.s32 %s24, %s36
      %s38 = ssub.s32 %s25, %s32
      %s39 = sor.u32 %s37, %s38
      %p40 = scmp.eq.s32.totalorder %s39, 0
      %s42 = sadd.s32 %s41, 1
      %s43 = scalar_select %p40, %s41, %s42
      %p46 = pneg %p40
      %p47 = scmp.eq.s32.totalorder %s17, 1
      %p48 = por %p46, %p47
      %p49 = scmp.ne.s32.totalorder %s41, %s44
      %p50 = scmp.eq.s32.totalorder %s17, 0
      %p51 = por %p49, %p50
      %p52 = scmp.ne.s32.totalorder %s41, %s44
      %p53 = scmp.eq.s32.totalorder %s22, 1
      %p54 = por %p52, %p53
      %p55 = scmp.ne.s32.totalorder %s44, %s45
      %p56 = scmp.eq.s32.totalorder %s22, 0
      %p57 = por %p55, %p56
      %p58 = scmp.ne.s32.totalorder %s44, %s45
      %p59 = scmp.eq.s32.totalorder %s23, 1
      %p60 = por %p58, %p59
      %p62 = scmp.ne.s32.totalorder %s45, %s61
      %p63 = scmp.eq.s32.totalorder %s23, 0
      %p64 = por %p62, %p63
      %s65 = ssub.s32 %s24, %s36
      %s66 = ssub.s32 %s25, %s32
      %s67 = sor.u32 %s65, %s66
      %p68 = scmp.eq.s32.totalorder %s67, 0
      %s70 = sadd.s32 %s69, 1
      %s71 = scalar_select %p68, %s69, %s70
      %p74 = pneg %p68
      %p75 = scmp.eq.s32.totalorder %s17, 1
      %p76 = por %p74, %p75
      %p77 = scmp.ne.s32.totalorder %s69, %s72
      %p78 = scmp.eq.s32.totalorder %s17, 0
      %p79 = por %p77, %p78
      %p80 = scmp.ne.s32.totalorder %s69, %s72
      %p81 = scmp.eq.s32.totalorder %s22, 1
      %p82 = por %p80, %p81
      %p83 = scmp.ne.s32.totalorder %s72, %s73
      %p84 = scmp.eq.s32.totalorder %s22, 0
      %p85 = por %p83, %p84
      %p86 = scmp.ne.s32.totalorder %s72, %s73
      %p87 = scmp.eq.s32.totalorder %s23, 1
      %p88 = por %p86, %p87
      %p90 = scmp.ne.s32.totalorder %s73, %s89
      %p91 = scmp.eq.s32.totalorder %s23, 0
      %p92 = por %p90, %p91
      %s93 = ssub.s32 %s24, %s36
      %p94 = scmp.eq.s32.totalorder %s93, 0
      %s96 = sadd.s32 %s95, 1
      %s97 = scalar_select %p94, %s95, %s96
      %p100 = pneg %p94
      %p101 = scmp.eq.s32.totalorder %s17, 1
      %p102 = por %p100, %p101
      %p103 = scmp.ne.s32.totalorder %s95, %s98
      %p104 = scmp.eq.s32.totalorder %s17, 0
      %p105 = por %p103, %p104
      %p106 = scmp.ne.s32.totalorder %s95, %s98
      %p107 = scmp.eq.s32.totalorder %s22, 1
      %p108 = por %p106, %p107
      %p109 = scmp.ne.s32.totalorder %s98, %s99
      %p110 = scmp.eq.s32.totalorder %s22, 0
      %p111 = por %p109, %p110
      %p112 = scmp.ne.s32.totalorder %s98, %s99
      %p113 = scmp.eq.s32.totalorder %s23, 1
      %p114 = por %p112, %p113
      %p116 = scmp.ne.s32.totalorder %s99, %s115
      %p117 = scmp.eq.s32.totalorder %s23, 0
      %p118 = por %p116, %p117
      %p119 = scmp.le.s32.totalorder 1, %s17
      %p120 = scmp.lt.s32.totalorder %s17, 3
      %p121 = pnand %p119, %p120
      %p122 = pneg %p121
      // Predicated region
      $region9: #{tpu_custom_call.1} parent=5 // pred_check
        _
      $region10: #{tpu_custom_call.1} parent=5 // pred_check_branch
        %124 = sbr.rel (%p121) target = $region12
      $region11: #{tpu_custom_call.1} parent=5 // pred_region
        %s125 = ssub.s32 %s17, 1
      $region12: #{tpu_custom_call.1} parent=5 // pred_fallthru
        _
      %p126 = scmp.lt.s32.totalorder %s17, 2
      // Predicated region
      $region13: #{tpu_custom_call.1} parent=5 // pred_check
        %p127 = pneg %p126
      $region14: #{tpu_custom_call.1} parent=5 // pred_check_branch
        %129 = sbr.rel (%p127) target = $region16
      $region15: #{tpu_custom_call.1} parent=5 // pred_region
        // Predicated region
        $region17: #{tpu_custom_call.1} parent=15 // pred_check
          %p130 = pneg %p51
        $region18: #{tpu_custom_call.1} parent=15 // pred_check_branch
          %132 = sbr.rel (%p130) target = $region20
        $region19: #{tpu_custom_call.1} parent=15 // pred_region
          %s133 = sand.u32 %s41, 1
          %s134 = scalar_lea.sflag [#allocation4], %s133
          %s135 = sand.u32 %s41, 1
          %s136 = smul.addr %s135, 10
          %s137 = scalar_lea.vmem [#allocation3], %s136
          %s139 = ssub.s32 160, 160
          %140 = vsyncadd %s134, %s139
          %s141 = smul.addr %s24, 5
          %s142 = sadd.s32 %s25, %s141
          %s143 = smul.addr %s142, 32
          %s144 = scalar_lea.hbm %s0, %s143
          %s145 = sshll.u32 %s137, 4
          %s146 = int_to_ptr.vmem [resolvable:$true] %s145
          %151 = dma.hbm_to_vmem [thread:$0]  %s144, 160, %s146, %s134, 32, 32, 2
        $region20: #{tpu_custom_call.1} parent=15 // pred_fallthru
          _
        // Predicated region
        $region21: #{tpu_custom_call.1} parent=15 // pred_check
          %p152 = pneg %p79
        $region22: #{tpu_custom_call.1} parent=15 // pred_check_branch
          %154 = sbr.rel (%p152) target = $region24
        $region23: #{tpu_custom_call.1} parent=15 // pred_region
          %s155 = sand.u32 %s69, 1
          %s156 = scalar_lea.sflag [#allocation7], %s155
          %s157 = sand.u32 %s69, 1
          %s158 = smul.addr %s157, 10
          %s159 = scalar_lea.vmem [#allocation6], %s158
          %s161 = ssub.s32 160, 160
          %162 = vsyncadd %s156, %s161
          %s163 = smul.addr %s24, 5
          %s164 = sadd.s32 %s25, %s163
          %s165 = smul.addr %s164, 32
          %s166 = scalar_lea.hbm %s1, %s165
          %s167 = sshll.u32 %s159, 4
          %s168 = int_to_ptr.vmem [resolvable:$true] %s167
          %173 = dma.hbm_to_vmem [thread:$0]  %s166, 160, %s168, %s156, 32, 32, 2
        $region24: #{tpu_custom_call.1} parent=15 // pred_fallthru
          _
      $region16: #{tpu_custom_call.1} parent=5 // pred_fallthru
        _
      %p174 = scmp.le.s32.totalorder 1, %s17
      %p175 = scmp.lt.s32.totalorder %s17, 3
      %p176 = pnand %p174, %p175
      %p177 = pneg %p176
      // Predicated region
      $region25: #{tpu_custom_call.1} parent=5 // pred_check
        _
      $region26: #{tpu_custom_call.1} parent=5 // pred_check_branch
        %179 = sbr.rel (%p176) target = $region28
      $region27: #{tpu_custom_call.1} parent=5 // pred_region
        %s180 = ssub.s32 %s17, 1
        %s181 = sand.u32 %s44, 1
        %s182 = scalar_lea.sflag [#allocation4], %s181
        %s183 = sand.u32 %s44, 1
        %s184 = smul.addr %s183, 10
        %s185 = scalar_lea.vmem [#allocation3], %s184
        // Predicated region
        $region29: #{tpu_custom_call.1} parent=27 // pred_check
          %p186 = pneg %p57
        $region30: #{tpu_custom_call.1} parent=27 // pred_check_branch
          %188 = sbr.rel (%p186) target = $region32
        $region31: #{tpu_custom_call.1} parent=27 // pred_region
          %189 = dma.done %s182, 160
        $region32: #{tpu_custom_call.1} parent=27 // pred_fallthru
          _
        %s190 = sand.u32 %s72, 1
        %s191 = scalar_lea.sflag [#allocation7], %s190
        %s192 = sand.u32 %s72, 1
        %s193 = smul.addr %s192, 10
        %s194 = scalar_lea.vmem [#allocation6], %s193
        // Predicated region
        $region33: #{tpu_custom_call.1} parent=27 // pred_check
          %p195 = pneg %p85
        $region34: #{tpu_custom_call.1} parent=27 // pred_check_branch
          %197 = sbr.rel (%p195) target = $region36
        $region35: #{tpu_custom_call.1} parent=27 // pred_region
          %198 = dma.done %s191, 160
        $region36: #{tpu_custom_call.1} parent=27 // pred_fallthru
          _
        %s199 = sand.u32 %s44, 1
        %s200 = scalar_lea.sflag [#allocation4], %s199
        %s201 = sand.u32 %s44, 1
        %s202 = smul.addr %s201, 10
        %s203 = scalar_lea.vmem [#allocation3], %s202
        %p204 = pneg %p57
        %p205 = pneg %p54
        %s206 = sand.u32 %s72, 1
        %s207 = scalar_lea.sflag [#allocation7], %s206
        %s208 = sand.u32 %s72, 1
        %s209 = smul.addr %s208, 10
        %s210 = scalar_lea.vmem [#allocation6], %s209
        %p211 = pneg %p85
        %p212 = pneg %p82
        %p213 = pneg %p111
        %p214 = pneg %p108
        %s215 = sand.u32 %s98, 1
        %s216 = scalar_lea.sflag [#allocation5], %s215
        %s217 = sand.u32 %s98, 1
        %s218 = smul.addr %s217, 6
        %s219 = scalar_lea.vmem [#allocation8], %s218
        %p220 = scmp.eq.s32.totalorder %s27, 0
        // Predicated region
        $region37: #{tpu_custom_call.1} parent=27 // pred_check
          %p221 = pneg %p220
        $region38: #{tpu_custom_call.1} parent=27 // pred_check_branch
          %223 = sbr.rel (%p221) target = $region40
        $region39: #{tpu_custom_call.1} parent=27 // pred_region
          %224 = vst [vmem:[#allocation2] sm:$0x3] 0.0
          %225 = vst [vmem:[#allocation2 + $0x2] sm:$0x3] 0.0
          %226 = vst [vmem:[#allocation2 + $0x4] sm:$0x3] 0.0
        $region40: #{tpu_custom_call.1} parent=27 // pred_fallthru
          _
        %v227 = vld [vmem:[%s185] sm:$0x3]
        %v228 = vld [vmem:[%s194] sm:$0x3]
        %v229 = vsub.f32 %v227, %v228
        %v230 = vmul.f32 %v229, %v229
        %s231 = scalar_lea.vmem %s185, 2 [#allocation3]
        %v232 = vld [vmem:[%s231] sm:$0x3]
        %s233 = scalar_lea.vmem %s194, 2 [#allocation6]
        %v234 = vld [vmem:[%s233] sm:$0x3]
        %v235 = vsub.f32 %v232, %v234
        %v236 = vmul.f32 %v228, %v235
        %v237 = vmul.f32 %v236, %v235
        %v238 = vadd.f32 %v237, 0.0
        %s239 = scalar_lea.vmem %s185, 4 [#allocation3]
        %v240 = vld [vmem:[%s239] sm:$0x3]
        %s241 = scalar_lea.vmem %s194, 4 [#allocation6]
        %v242 = vld [vmem:[%s241] sm:$0x3]
        %v243 = vsub.f32 %v240, %v242
        %v244 = vmul.f32 %v228, %v243
        %v245 = vmul.f32 %v244, %v243
        %v246 = vadd.f32 %v238, %v245
        %s247 = scalar_lea.vmem %s185, 6 [#allocation3]
        %v248 = vld [vmem:[%s247] sm:$0x3]
        %s249 = scalar_lea.vmem %s194, 6 [#allocation6]
        %v250 = vld [vmem:[%s249] sm:$0x3]
        %v251 = vsub.f32 %v248, %v250
        %v252 = vmul.f32 %v228, %v251
        %v253 = vmul.f32 %v252, %v251
        %v254 = vadd.f32 %v246, %v253
        %s255 = scalar_lea.vmem %s185, 8 [#allocation3]
        %v256 = vld [vmem:[%s255] sm:$0x3]
        %s257 = scalar_lea.vmem %s194, 8 [#allocation6]
        %v258 = vld [vmem:[%s257] sm:$0x3]
        %v259 = vsub.f32 %v256, %v258
        %v260 = vmul.f32 %v228, %v259
        %v261 = vmul.f32 %v260, %v259
        %v262 = vadd.f32 %v254, %v261
        %v263 = vld [vmem:[#allocation2] sm:$0x3]
        %v264 = vadd.f32 %v263, %v230
        %265 = vst [vmem:[#allocation2] sm:$0x3] %v264
        %s266 = scalar_lea.vmem [#allocation2], 2
        %v267 = vld [vmem:[%s266] sm:$0x3]
        %v268 = vadd.f32 %v267, %v262
        %269 = vst [vmem:[%s266] sm:$0x3] %v268
        %s270 = scalar_lea.vmem [#allocation2], 4
        %v271 = vld [vmem:[%s270] sm:$0x3]
        %v272 = vadd.f32 %v271, %v228
        %273 = vst [vmem:[%s270] sm:$0x3] %v272
        // Predicated region
        $region41: #{tpu_custom_call.1} parent=27 // pred_check
          %p274 = pneg %p220
        $region42: #{tpu_custom_call.1} parent=27 // pred_check_branch
          %276 = sbr.rel (%p274) target = $region44
        $region43: #{tpu_custom_call.1} parent=27 // pred_region
          %v277 = vld [vmem:[#allocation2] sm:$0x3]
          %v278 = vld [vmem:[#allocation2 + $0x2] sm:$0x3]
          %v279 = vld [vmem:[#allocation2 + $0x4] sm:$0x3]
          %280 = vst [vmem:[%s219] sm:$0x3] %v277
          %281 = vst [vmem:[%s219 + $0x2] sm:$0x3] %v278
          %282 = vst [vmem:[%s219 + $0x4] sm:$0x3] %v279
        $region44: #{tpu_custom_call.1} parent=27 // pred_fallthru
          _
        %s283 = sand.u32 %s98, 1
        %s284 = scalar_lea.sflag [#allocation5], %s283
        %s285 = sand.u32 %s98, 1
        %s286 = smul.addr %s285, 6
        %s287 = scalar_lea.vmem [#allocation8], %s286
        // Predicated region
        $region45: #{tpu_custom_call.1} parent=27 // pred_check
          %p288 = pneg %p108
        $region46: #{tpu_custom_call.1} parent=27 // pred_check_branch
          %290 = sbr.rel (%p288) target = $region48
        $region47: #{tpu_custom_call.1} parent=27 // pred_region
          %s292 = ssub.s32 96, 96
          %293 = vsyncadd %s284, %s292
          %s294 = smul.addr %s26, 3
          %s295 = smul.addr %s294, 32
          %s296 = scalar_lea.hbm %s2, %s295
          %s297 = sshll.u32 %s287, 4
          %s298 = int_to_ptr.vmem [resolvable:$true] %s297
          %303 = dma.vmem_to_hbm [thread:$0]  %s298, 96, %s296, %s284, 32, 32, 2
        $region48: #{tpu_custom_call.1} parent=27 // pred_fallthru
          _
      $region28: #{tpu_custom_call.1} parent=5 // pred_fallthru
        _
      %p304 = scmp.le.s32.totalorder 2, %s17
      // Predicated region
      $region49: #{tpu_custom_call.1} parent=5 // pred_check
        %p305 = pneg %p304
      $region50: #{tpu_custom_call.1} parent=5 // pred_check_branch
        %307 = sbr.rel (%p305) target = $region52
      $region51: #{tpu_custom_call.1} parent=5 // pred_region
        %s308 = ssub.s32 %s17, 2
        // Predicated region
        $region53: #{tpu_custom_call.1} parent=51 // pred_check
          %p309 = pneg %p114
        $region54: #{tpu_custom_call.1} parent=51 // pred_check_branch
          %311 = sbr.rel (%p309) target = $region56
        $region55: #{tpu_custom_call.1} parent=51 // pred_region
          %s312 = sand.u32 %s99, 1
          %s313 = scalar_lea.sflag [#allocation5], %s312
          %s314 = sand.u32 %s99, 1
          %s315 = smul.addr %s314, 6
          %s316 = scalar_lea.vmem [#allocation8], %s315
          %317 = dma.done %s313, 96
        $region56: #{tpu_custom_call.1} parent=51 // pred_fallthru
          _
      $region52: #{tpu_custom_call.1} parent=5 // pred_fallthru
        _
    $region6: #{tpu_custom_call.1} parent=1 // loop_footer
      %s21 = sadd.s32 1, %s17
    $region7: #{tpu_custom_call.1} parent=1 // loop_footer_branch
      %16 = sbr.rel target = $region3
    $region8: #{tpu_custom_call.1} parent=1 // loop_exit
      _
    %318 = vsyncpa [#allocation4], 1
    %s319 = scalar_lea.sflag [#allocation4], 1
    %320 = vsyncpa %s319, 1
    %321 = vsyncpa [#allocation7], 1
    %s322 = scalar_lea.sflag [#allocation7], 1
    %323 = vsyncpa %s322, 1
    %324 = vsyncpa [#allocation5], 1
    %s325 = scalar_lea.sflag [#allocation5], 1
    %326 = vsyncpa %s325, 1

</llo_original>
